<compile_context>
chip_gen: v7x
topology: tpu7x:2x2x1
jax: 0.10.0
libtpu: 0.0.40
codegen_flags: <defaults>
</compile_context>

<pallas_src>
import jax
import jax.numpy as jnp
from jax.experimental import pallas as pl
from jax.experimental.pallas import tpu as pltpu

W_HID = 128       # hidden width
IN_FEAT = 16      # input_feat_dim (identity embedder -> input_ch == 16)


def _round_up(x, m):
    return (x + m - 1) // m * m


def _cdiv(a, b):
    return (a + b - 1) // b


def geometry_decoder_kernel(x_ref,
                            w0t_ref, w1t_ref, w2t_ref, w3t_ref,
                            c_ref,        # packed (128, 8): b0 b1 b2 b3 | w4 | b4 | pad
                            o_ref):
    # x tile: (TN, 16) bf16.  Layer 0 computes h^T = W0^T @ x^T directly via a
    # dot_general contracting the last dim of both operands, yielding the transposed
    # activation layout (128, TN) with f32 accumulation.
    x = x_ref[...]
    h = jax.lax.dot_general(
        w0t_ref[...], x,
        dimension_numbers=(((1,), (1,)), ((), ())),
        preferred_element_type=jnp.float32)                       # (128, TN) f32
    # Fused epilogue: bias + ReLU + single bf16 cast (feeds the next MXU matmul).
    h = jnp.maximum(h + c_ref[:, 0:1], 0.0).astype(jnp.bfloat16)

    # Hidden layers 1..2: bf16 operands on the MXU, f32 accumulation, fused epilogue.
    for idx, wt_ref in ((1, w1t_ref), (2, w2t_ref)):
        h = jnp.dot(wt_ref[...], h, preferred_element_type=jnp.float32)
        h = jnp.maximum(h + c_ref[:, idx:idx + 1], 0.0).astype(jnp.bfloat16)

    # Last hidden layer: keep the f32 epilogue (its output feeds only the VPU
    # projection below, so a bf16 cast would cost precision and save nothing).
    h = jnp.dot(w3t_ref[...], h, preferred_element_type=jnp.float32)
    h = jnp.maximum(h + c_ref[:, 3:4], 0.0)                        # (128, TN) f32

    # Final 128 -> 1 projection on the VPU/XLU (sublane reduction), not an N=1 matmul;
    # the result (1, TN) is already lane-dense for the store.
    logits = jnp.sum(c_ref[:, 4:5] * h, axis=0, keepdims=True) + c_ref[0:1, 5:6]
    o_ref[...] = jax.nn.sigmoid(logits)[None].astype(o_ref.dtype)  # (1, 1, TN)


def geometry_decoder(feat, params, *, tile_n=8192):
    """feat: (..., IN_FEAT) float32. Returns (..., 1) float32 (sigmoid output)."""
    lead_shape = feat.shape[:-1]
    x = feat.reshape(-1, IN_FEAT)
    n = x.shape[0]

    # Row tile: multiple of 128 (lane-dense output), as large as requested but clamped so
    # medium-sized inputs still produce >=4 grid steps (lets "parallel" shard across the
    # two v7x TensorCores instead of collapsing to a single step on one core).
    tile = min(_round_up(tile_n, 128), _round_up(max(n, 1), 128))
    if n > 128:
        tile = min(tile, max(128, _round_up(_cdiv(n, 4), 128)))
    n_pad = _round_up(n, tile)
    if n_pad != n:
        x = jnp.pad(x, ((0, n_pad - n), (0, 0)))
    x = x.astype(jnp.bfloat16)      # halves x DMA and the lane-padded VMEM footprint
    grid = n_pad // tile

    (w0, b0), (w1, b1), (w2, b2), (w3, b3), (w4, b4) = params
    # Pre-transpose to (out_features, in_features) and pre-cast to bf16 so the (one-time)
    # weight DMA is half-size and every matmul (incl. layer 0) runs native bf16 on the MXU.
    w0t = w0.T.astype(jnp.bfloat16)           # (128, 16)
    w1t = w1.T.astype(jnp.bfloat16)           # (128, 128)
    w2t = w2.T.astype(jnp.bfloat16)
    w3t = w3.T.astype(jnp.bfloat16)
    # Pack all small constants into one (128, 8) f32 array:
    #   cols 0..3 = b0..b3, col 4 = w4 (as a column), col 5 = b4 broadcast, cols 6..7 pad.
    consts = jnp.concatenate(
        [b0.reshape(W_HID, 1), b1.reshape(W_HID, 1),
         b2.reshape(W_HID, 1), b3.reshape(W_HID, 1),
         w4.reshape(W_HID, 1),
         jnp.full((W_HID, 1), jnp.reshape(b4, ()), jnp.float32),
         jnp.zeros((W_HID, 2), jnp.float32)],
        axis=1).astype(jnp.float32)           # (128, 8)

    def const_spec(arr):
        # Full-array block with a constant index_map: DMA'd once, VMEM-resident across steps.
        return pl.BlockSpec(arr.shape, lambda i: (0, 0))

    out = pl.pallas_call(
        geometry_decoder_kernel,
        out_shape=jax.ShapeDtypeStruct((grid, 1, tile), jnp.float32),
        grid_spec=pltpu.PrefetchScalarGridSpec(
            num_scalar_prefetch=0,
            grid=(grid,),
            in_specs=[
                pl.BlockSpec((tile, IN_FEAT), lambda i: (i, 0)),
                const_spec(w0t), const_spec(w1t), const_spec(w2t), const_spec(w3t),
                const_spec(consts),
            ],
            out_specs=pl.BlockSpec((1, 1, tile), lambda i: (i, 0, 0)),
        ),
        compiler_params=pltpu.CompilerParams(
            dimension_semantics=("parallel",),
            # Explicit budget: tile=8192 keeps x (bf16, double-buffered) + f32/bf16 h
            # temporaries well under this on all of v5e/v6e/v7x (64 MiB physical on v7x).
            vmem_limit_bytes=48 * 1024 * 1024),
    )(x, w0t, w1t, w2t, w3t, consts)

    y = out.reshape(-1)[:n]
    return y.reshape(*lead_shape, 1)


def init_params(key):
    """Deterministic synthetic weights, shapes matching nn.Linear(in,out)."""
    dims = [(IN_FEAT, W_HID), (W_HID, W_HID), (W_HID, W_HID), (W_HID, W_HID), (W_HID, 1)]
    params = []
    for (din, dout) in dims:
        key, kw, kb = jax.random.split(key, 3)
        bound = 1.0 / jnp.sqrt(din)
        w = jax.random.uniform(kw, (din, dout), jnp.float32, -bound, bound)
        b = jax.random.uniform(kb, (1, dout), jnp.float32, -bound, bound)
        params.append((w, b))
    return params


def geometry_decoder_ref(feat, params):
    """Pure-JAX f32 reference matching the PyTorch forward (identity embedder)."""
    h = feat
    for i, (w, b) in enumerate(params):
        h = h @ w + b[0]
        if i != len(params) - 1:
            h = jnp.maximum(h, 0.0)
    return jax.nn.sigmoid(h)[..., :1]


if __name__ == "__main__":
    key = jax.random.PRNGKey(0)
    key, kfeat = jax.random.split(key)

    params = init_params(key)
    # small batch of points: (batch=2, seq=72, feat=16) -> 144 rows
    # (exercises padding and a 2-step "parallel" grid)
    feat = jax.random.normal(kfeat, (2, 72, IN_FEAT), jnp.float32)

    out = geometry_decoder(feat, params)
    out = jax.block_until_ready(out)

    ref = geometry_decoder_ref(feat, params)
    assert out.shape == (2, 72, 1)
    # bf16 matmul operands / bf16 activations (f32 accumulation) -> loosened tolerance
    # vs the f32 reference.
    assert jnp.allclose(out, ref, atol=3e-2), float(jnp.max(jnp.abs(out - ref)))

    print("KERNEL_OK")
</pallas_src>

<mosaic_0001>
module attributes {stable_mosaic.version = 11 : i64} {
  func.func @geometry_decoder_kernel(%arg0: i32, %arg1: memref<128x16xbf16, #tpu.memory_space<vmem>>, %arg2: memref<128x16xbf16, #tpu.memory_space<vmem>>, %arg3: memref<128x128xbf16, #tpu.memory_space<vmem>>, %arg4: memref<128x128xbf16, #tpu.memory_space<vmem>>, %arg5: memref<128x128xbf16, #tpu.memory_space<vmem>>, %arg6: memref<128x8xf32, #tpu.memory_space<vmem>>, %arg7: memref<1x1x128xf32, #tpu.memory_space<vmem>>) attributes {dimension_semantics = [#tpu.dimension_semantics<parallel>], iteration_bounds = array<i64: 2>, scalar_prefetch = 0 : i64, scratch_operands = 0 : i64, tpu.core_type = #tpu.core_type<tc>, window_params = [{transform_indices = @transform_0, window_bounds = array<i64: 128, 16>}, {pipeline_mode = #tpu.pipeline_mode<synchronous>, transform_indices = @transform_1, window_bounds = array<i64: 128, 16>}, {pipeline_mode = #tpu.pipeline_mode<synchronous>, transform_indices = @transform_2, window_bounds = array<i64: 128, 128>}, {pipeline_mode = #tpu.pipeline_mode<synchronous>, transform_indices = @transform_3, window_bounds = array<i64: 128, 128>}, {pipeline_mode = #tpu.pipeline_mode<synchronous>, transform_indices = @transform_4, window_bounds = array<i64: 128, 128>}, {pipeline_mode = #tpu.pipeline_mode<synchronous>, transform_indices = @transform_5, window_bounds = array<i64: 128, 8>}, {transform_indices = @transform_6, window_bounds = array<i64: 1, 1, 128>}]} {
    %c0 = arith.constant 0 : index
    %c0_0 = arith.constant 0 : index
    %0 = vector.load %arg1[%c0, %c0_0] : memref<128x16xbf16, #tpu.memory_space<vmem>>, vector<128x16xbf16>
    %c0_1 = arith.constant 0 : index
    %c0_2 = arith.constant 0 : index
    %1 = vector.load %arg2[%c0_1, %c0_2] : memref<128x16xbf16, #tpu.memory_space<vmem>>, vector<128x16xbf16>
    %cst = arith.constant dense<0.000000e+00> : vector<128x128xf32>
    %2 = tpu.matmul %1, %0, %cst {dimension_numbers = #tpu.dot_dimension_numbers<[1], [1], [0], [0], [0, 0, 1, 0], [], []>} : vector<128x16xbf16>, vector<128x16xbf16>, vector<128x128xf32> -> vector<128x128xf32>
    %c0_3 = arith.constant 0 : index
    %c0_4 = arith.constant 0 : index
    %3 = vector.load %arg6[%c0_3, %c0_4] : memref<128x8xf32, #tpu.memory_space<vmem>>, vector<128x1xf32>
    %4 = vector.broadcast %3 : vector<128x1xf32> to vector<128x128xf32>
    %5 = arith.addf %2, %4 : vector<128x128xf32>
    %cst_5 = arith.constant 0.000000e+00 : f32
    %6 = vector.broadcast %cst_5 : f32 to vector<128x128xf32>
    %7 = arith.maximumf %5, %6 : vector<128x128xf32>
    %8 = arith.truncf %7 : vector<128x128xf32> to vector<128x128xbf16>
    %c0_6 = arith.constant 0 : index
    %c0_7 = arith.constant 0 : index
    %9 = vector.load %arg3[%c0_6, %c0_7] : memref<128x128xbf16, #tpu.memory_space<vmem>>, vector<128x128xbf16>
    %cst_8 = arith.constant dense<0.000000e+00> : vector<128x128xf32>
    %10 = tpu.matmul %9, %8, %cst_8 {dimension_numbers = #tpu.dot_dimension_numbers<[1], [0], [0], [1], [0, 0, 1, 1], [], []>} : vector<128x128xbf16>, vector<128x128xbf16>, vector<128x128xf32> -> vector<128x128xf32>
    %c0_9 = arith.constant 0 : index
    %c1 = arith.constant 1 : index
    %11 = vector.load %arg6[%c0_9, %c1] : memref<128x8xf32, #tpu.memory_space<vmem>>, vector<128x1xf32>
    %12 = vector.broadcast %11 : vector<128x1xf32> to vector<128x128xf32>
    %13 = arith.addf %10, %12 : vector<128x128xf32>
    %cst_10 = arith.constant 0.000000e+00 : f32
    %14 = vector.broadcast %cst_10 : f32 to vector<128x128xf32>
    %15 = arith.maximumf %13, %14 : vector<128x128xf32>
    %16 = arith.truncf %15 : vector<128x128xf32> to vector<128x128xbf16>
    %c0_11 = arith.constant 0 : index
    %c0_12 = arith.constant 0 : index
    %17 = vector.load %arg4[%c0_11, %c0_12] : memref<128x128xbf16, #tpu.memory_space<vmem>>, vector<128x128xbf16>
    %cst_13 = arith.constant dense<0.000000e+00> : vector<128x128xf32>
    %18 = tpu.matmul %17, %16, %cst_13 {dimension_numbers = #tpu.dot_dimension_numbers<[1], [0], [0], [1], [0, 0, 1, 1], [], []>} : vector<128x128xbf16>, vector<128x128xbf16>, vector<128x128xf32> -> vector<128x128xf32>
    %c0_14 = arith.constant 0 : index
    %c2 = arith.constant 2 : index
    %19 = vector.load %arg6[%c0_14, %c2] : memref<128x8xf32, #tpu.memory_space<vmem>>, vector<128x1xf32>
    %20 = vector.broadcast %19 : vector<128x1xf32> to vector<128x128xf32>
    %21 = arith.addf %18, %20 : vector<128x128xf32>
    %cst_15 = arith.constant 0.000000e+00 : f32
    %22 = vector.broadcast %cst_15 : f32 to vector<128x128xf32>
    %23 = arith.maximumf %21, %22 : vector<128x128xf32>
    %24 = arith.truncf %23 : vector<128x128xf32> to vector<128x128xbf16>
    %c0_16 = arith.constant 0 : index
    %c0_17 = arith.constant 0 : index
    %25 = vector.load %arg5[%c0_16, %c0_17] : memref<128x128xbf16, #tpu.memory_space<vmem>>, vector<128x128xbf16>
    %cst_18 = arith.constant dense<0.000000e+00> : vector<128x128xf32>
    %26 = tpu.matmul %25, %24, %cst_18 {dimension_numbers = #tpu.dot_dimension_numbers<[1], [0], [0], [1], [0, 0, 1, 1], [], []>} : vector<128x128xbf16>, vector<128x128xbf16>, vector<128x128xf32> -> vector<128x128xf32>
    %c0_19 = arith.constant 0 : index
    %c3 = arith.constant 3 : index
    %27 = vector.load %arg6[%c0_19, %c3] : memref<128x8xf32, #tpu.memory_space<vmem>>, vector<128x1xf32>
    %28 = vector.broadcast %27 : vector<128x1xf32> to vector<128x128xf32>
    %29 = arith.addf %26, %28 : vector<128x128xf32>
    %cst_20 = arith.constant 0.000000e+00 : f32
    %30 = vector.broadcast %cst_20 : f32 to vector<128x128xf32>
    %31 = arith.maximumf %29, %30 : vector<128x128xf32>
    %c0_21 = arith.constant 0 : index
    %c4 = arith.constant 4 : index
    %32 = vector.load %arg6[%c0_21, %c4] : memref<128x8xf32, #tpu.memory_space<vmem>>, vector<128x1xf32>
    %33 = vector.broadcast %32 : vector<128x1xf32> to vector<128x128xf32>
    %34 = arith.mulf %33, %31 : vector<128x128xf32>
    %cst_22 = arith.constant dense<0.000000e+00> : vector<128xf32>
    %35 = vector.multi_reduction <add>, %34, %cst_22 [0] : vector<128x128xf32> to vector<128xf32>
    %36 = vector.shape_cast %35 : vector<128xf32> to vector<1x128xf32>
    %c0_23 = arith.constant 0 : index
    %c5 = arith.constant 5 : index
    %37 = vector.load %arg6[%c0_23, %c5] : memref<128x8xf32, #tpu.memory_space<vmem>>, vector<1x1xf32>
    %38 = vector.broadcast %37 : vector<1x1xf32> to vector<1x128xf32>
    %39 = arith.addf %36, %38 : vector<1x128xf32>
    %40 = arith.negf %39 : vector<1x128xf32>
    %41 = math.exp %40 : vector<1x128xf32>
    %cst_24 = arith.constant 1.000000e+00 : f32
    %42 = vector.broadcast %cst_24 : f32 to vector<1x128xf32>
    %43 = arith.addf %42, %41 : vector<1x128xf32>
    %44 = arith.divf %42, %43 : vector<1x128xf32>
    %45 = vector.shape_cast %44 : vector<1x128xf32> to vector<1x1x128xf32>
    %c0_25 = arith.constant 0 : index
    %c0_26 = arith.constant 0 : index
    %c0_27 = arith.constant 0 : index
    %46 = vector.load %arg7[%c0_25, %c0_26, %c0_27] : memref<1x1x128xf32, #tpu.memory_space<vmem>>, vector<1x1x128xf32>
    tpu.vector_store %arg7[%c0_25, %c0_26, %c0_27], %45 {strides = array<i32>} : memref<1x1x128xf32, #tpu.memory_space<vmem>>, vector<1x1x128xf32>,
    return
  }
  func.func @transform_0(%arg0: i32) -> (i32, i32) {
    %c0_i32 = arith.constant 0 : i32
    %c0_i32_0 = arith.constant 0 : i32
    return %arg0, %c0_i32 : i32, i32
  }
  func.func @transform_1(%arg0: i32) -> (i32, i32) {
    %c0_i32 = arith.constant 0 : i32
    %c0_i32_0 = arith.constant 0 : i32
    %c0_i32_1 = arith.constant 0 : i32
    return %c0_i32, %c0_i32_0 : i32, i32
  }
  func.func @transform_2(%arg0: i32) -> (i32, i32) {
    %c0_i32 = arith.constant 0 : i32
    %c0_i32_0 = arith.constant 0 : i32
    %c0_i32_1 = arith.constant 0 : i32
    return %c0_i32, %c0_i32_0 : i32, i32
  }
  func.func @transform_3(%arg0: i32) -> (i32, i32) {
    %c0_i32 = arith.constant 0 : i32
    %c0_i32_0 = arith.constant 0 : i32
    %c0_i32_1 = arith.constant 0 : i32
    return %c0_i32, %c0_i32_0 : i32, i32
  }
  func.func @transform_4(%arg0: i32) -> (i32, i32) {
    %c0_i32 = arith.constant 0 : i32
    %c0_i32_0 = arith.constant 0 : i32
    %c0_i32_1 = arith.constant 0 : i32
    return %c0_i32, %c0_i32_0 : i32, i32
  }
  func.func @transform_5(%arg0: i32) -> (i32, i32) {
    %c0_i32 = arith.constant 0 : i32
    %c0_i32_0 = arith.constant 0 : i32
    %c0_i32_1 = arith.constant 0 : i32
    return %c0_i32, %c0_i32_0 : i32, i32
  }
  func.func @transform_6(%arg0: i32) -> (i32, i32, i32) {
    %c0_i32 = arith.constant 0 : i32
    %c0_i32_0 = arith.constant 0 : i32
    %c0_i32_1 = arith.constant 0 : i32
    return %arg0, %c0_i32, %c0_i32_0 : i32, i32, i32
  }
}

</mosaic_0001>

<llo_original>
// kernel: tpu_custom_call.1
$region0: #{tpu_custom_call.1}
  #allocation0 [shape = 'u32[]', space=smem, size = 0x4, offset = 0x4, fixed_abs, tag = 'smem constant byte address 0x4 - core index']
  #allocation1 [shape = 'u32[144,128]{1,0:T(1,128)}', space=vmem, size = 0x12000, scoped, tag = 'internal scratch']
  %s0 = inlined_call_operand.vmem [shape: bf16[256,16], index: 0, kind: input, shape index: {}]
  %s1 = inlined_call_operand.vmem [shape: bf16[128,16], index: 1, kind: input, shape index: {}]
  %s2 = inlined_call_operand.vmem [shape: bf16[128,128], index: 2, kind: input, shape index: {}]
  %s3 = inlined_call_operand.vmem [shape: bf16[128,128], index: 3, kind: input, shape index: {}]
  %s4 = inlined_call_operand.vmem [shape: bf16[128,128], index: 4, kind: input, shape index: {}]
  %s5 = inlined_call_operand.vmem [shape: f32[128,8], index: 5, kind: input, shape index: {}]
  %s6 = inlined_call_operand.hbm [shape: f32[2,1,128], index: 6, kind: output, shape index: {}]
  %s7 = sld [smem:[#allocation0]]
  $region57: #{tpu_custom_call.1} parent=0
    _
  %s9 = ssub.s32 1, %s7
  %s10 = scalar_select 0, %s9, %s7
  $region1: #{tpu_custom_call.1} parent=0
    #allocation2 [shape = 'u8[1024]{0}', space=vmem, size = 0x400, scoped, tag = 'output window, operand 0']
    #allocation3 [shape = 's32[2]{0}', space=sflag, size = 0x8, scoped, tag = 'scoped memory for tpu_custom_call.1']
    %11 = vsyncpa [#allocation3], 0
    %s12 = scalar_lea.sflag [#allocation3], 1
    %13 = vsyncpa %s12, 0
    loop: start=0, step=1, limit=4
    $region2: #{tpu_custom_call.1} parent=1 // loop_pre_header
      _
    $region3: #{tpu_custom_call.1} parent=1 // loop_header
      %s15 = sphi 0, %s19
      %p16 = scmp.ge.s32.totalorder %s15, 4
      %s25 = sphi 0, %s27
      %s28 = sphi 0, %s25
      %s29 = sphi 0, %s28
      %s45 = sphi 0, %s29
      %s49 = sphi 0, %s49
      %s51 = sphi 0, %s49
      %s52 = sphi 0, %s51
      %s66 = sphi 0, %s52
      %s70 = sphi 0, %s70
      %s72 = sphi 0, %s70
      %s73 = sphi 0, %s72
      %s87 = sphi 0, %s73
      %s91 = sphi 0, %s91
      %s93 = sphi 0, %s91
      %s94 = sphi 0, %s93
      %s108 = sphi 0, %s94
      %s112 = sphi 0, %s112
      %s114 = sphi 0, %s112
      %s115 = sphi 0, %s114
      %s129 = sphi 0, %s115
      %s133 = sphi 0, %s133
      %s135 = sphi 0, %s133
      %s136 = sphi 0, %s135
      %s150 = sphi 0, %s136
      %s156 = sphi 0, %s158
      %s159 = sphi 0, %s156
      %s160 = sphi 0, %s159
      %s176 = sphi 0, %s160
    $region4: #{tpu_custom_call.1} parent=1 // loop_header_branch
      %18 = sbr.rel (%p16) target = $region8
    $region5: #{tpu_custom_call.1} parent=1 // loop_body
      %s20 = ssub.s32 %s15, 1
      %s21 = ssub.s32 %s15, 2
      %s22 = sadd.s32 %s15, 1
      %s23 = ssub.s32 %s15, %s22
      %p24 = scmp.eq.s32.totalorder %s23, 0
      %s26 = sadd.s32 %s25, 1
      %s27 = scalar_select %p24, %s25, %s26
      %p30 = pneg %p24
      %p31 = scmp.eq.s32.totalorder %s15, 1
      %p32 = por %p30, %p31
      %p33 = scmp.ne.s32.totalorder %s25, %s28
      %p34 = scmp.eq.s32.totalorder %s15, 0
      %p35 = por %p33, %p34
      %p36 = scmp.ne.s32.totalorder %s25, %s28
      %p37 = scmp.eq.s32.totalorder %s20, 1
      %p38 = por %p36, %p37
      %p39 = scmp.ne.s32.totalorder %s28, %s29
      %p40 = scmp.eq.s32.totalorder %s20, 0
      %p41 = por %p39, %p40
      %p42 = scmp.ne.s32.totalorder %s28, %s29
      %p43 = scmp.eq.s32.totalorder %s21, 1
      %p44 = por %p42, %p43
      %p46 = scmp.ne.s32.totalorder %s29, %s45
      %p47 = scmp.eq.s32.totalorder %s21, 0
      %p48 = por %p46, %p47
      %s50 = sadd.s32 %s49, 1
      %p53 = scmp.eq.s32.totalorder %s15, 1
      %p54 = scmp.ne.s32.totalorder %s49, %s51
      %p55 = scmp.eq.s32.totalorder %s15, 0
      %p56 = por %p54, %p55
      %p57 = scmp.ne.s32.totalorder %s49, %s51
      %p58 = scmp.eq.s32.totalorder %s20, 1
      %p59 = por %p57, %p58
      %p60 = scmp.ne.s32.totalorder %s51, %s52
      %p61 = scmp.eq.s32.totalorder %s20, 0
      %p62 = por %p60, %p61
      %p63 = scmp.ne.s32.totalorder %s51, %s52
      %p64 = scmp.eq.s32.totalorder %s21, 1
      %p65 = por %p63, %p64
      %p67 = scmp.ne.s32.totalorder %s52, %s66
      %p68 = scmp.eq.s32.totalorder %s21, 0
      %p69 = por %p67, %p68
      %s71 = sadd.s32 %s70, 1
      %p74 = scmp.eq.s32.totalorder %s15, 1
      %p75 = scmp.ne.s32.totalorder %s70, %s72
      %p76 = scmp.eq.s32.totalorder %s15, 0
      %p77 = por %p75, %p76
      %p78 = scmp.ne.s32.totalorder %s70, %s72
      %p79 = scmp.eq.s32.totalorder %s20, 1
      %p80 = por %p78, %p79
      %p81 = scmp.ne.s32.totalorder %s72, %s73
      %p82 = scmp.eq.s32.totalorder %s20, 0
      %p83 = por %p81, %p82
      %p84 = scmp.ne.s32.totalorder %s72, %s73
      %p85 = scmp.eq.s32.totalorder %s21, 1
      %p86 = por %p84, %p85
      %p88 = scmp.ne.s32.totalorder %s73, %s87
      %p89 = scmp.eq.s32.totalorder %s21, 0
      %p90 = por %p88, %p89
      %s92 = sadd.s32 %s91, 1
      %p95 = scmp.eq.s32.totalorder %s15, 1
      %p96 = scmp.ne.s32.totalorder %s91, %s93
      %p97 = scmp.eq.s32.totalorder %s15, 0
      %p98 = por %p96, %p97
      %p99 = scmp.ne.s32.totalorder %s91, %s93
      %p100 = scmp.eq.s32.totalorder %s20, 1
      %p101 = por %p99, %p100
      %p102 = scmp.ne.s32.totalorder %s93, %s94
      %p103 = scmp.eq.s32.totalorder %s20, 0
      %p104 = por %p102, %p103
      %p105 = scmp.ne.s32.totalorder %s93, %s94
      %p106 = scmp.eq.s32.totalorder %s21, 1
      %p107 = por %p105, %p106
      %p109 = scmp.ne.s32.totalorder %s94, %s108
      %p110 = scmp.eq.s32.totalorder %s21, 0
      %p111 = por %p109, %p110
      %s113 = sadd.s32 %s112, 1
      %p116 = scmp.eq.s32.totalorder %s15, 1
      %p117 = scmp.ne.s32.totalorder %s112, %s114
      %p118 = scmp.eq.s32.totalorder %s15, 0
      %p119 = por %p117, %p118
      %p120 = scmp.ne.s32.totalorder %s112, %s114
      %p121 = scmp.eq.s32.totalorder %s20, 1
      %p122 = por %p120, %p121
      %p123 = scmp.ne.s32.totalorder %s114, %s115
      %p124 = scmp.eq.s32.totalorder %s20, 0
      %p125 = por %p123, %p124
      %p126 = scmp.ne.s32.totalorder %s114, %s115
      %p127 = scmp.eq.s32.totalorder %s21, 1
      %p128 = por %p126, %p127
      %p130 = scmp.ne.s32.totalorder %s115, %s129
      %p131 = scmp.eq.s32.totalorder %s21, 0
      %p132 = por %p130, %p131
      %s134 = sadd.s32 %s133, 1
      %p137 = scmp.eq.s32.totalorder %s15, 1
      %p138 = scmp.ne.s32.totalorder %s133, %s135
      %p139 = scmp.eq.s32.totalorder %s15, 0
      %p140 = por %p138, %p139
      %p141 = scmp.ne.s32.totalorder %s133, %s135
      %p142 = scmp.eq.s32.totalorder %s20, 1
      %p143 = por %p141, %p142
      %p144 = scmp.ne.s32.totalorder %s135, %s136
      %p145 = scmp.eq.s32.totalorder %s20, 0
      %p146 = por %p144, %p145
      %p147 = scmp.ne.s32.totalorder %s135, %s136
      %p148 = scmp.eq.s32.totalorder %s21, 1
      %p149 = por %p147, %p148
      %p151 = scmp.ne.s32.totalorder %s136, %s150
      %p152 = scmp.eq.s32.totalorder %s21, 0
      %p153 = por %p151, %p152
      %s154 = ssub.s32 %s15, %s22
      %p155 = scmp.eq.s32.totalorder %s154, 0
      %s157 = sadd.s32 %s156, 1
      %s158 = scalar_select %p155, %s156, %s157
      %p161 = pneg %p155
      %p162 = scmp.eq.s32.totalorder %s15, 1
      %p163 = por %p161, %p162
      %p164 = scmp.ne.s32.totalorder %s156, %s159
      %p165 = scmp.eq.s32.totalorder %s15, 0
      %p166 = por %p164, %p165
      %p167 = scmp.ne.s32.totalorder %s156, %s159
      %p168 = scmp.eq.s32.totalorder %s20, 1
      %p169 = por %p167, %p168
      %p170 = scmp.ne.s32.totalorder %s159, %s160
      %p171 = scmp.eq.s32.totalorder %s20, 0
      %p172 = por %p170, %p171
      %p173 = scmp.ne.s32.totalorder %s159, %s160
      %p174 = scmp.eq.s32.totalorder %s21, 1
      %p175 = por %p173, %p174
      %p177 = scmp.ne.s32.totalorder %s160, %s176
      %p178 = scmp.eq.s32.totalorder %s21, 0
      %p179 = por %p177, %p178
      %p180 = scmp.le.s32.totalorder 1, %s15
      %p181 = scmp.lt.s32.totalorder %s15, 3
      %p182 = pnand %p180, %p181
      %p183 = pneg %p182
      // Predicated region
      $region9: #{tpu_custom_call.1} parent=5 // pred_check
        _
      $region10: #{tpu_custom_call.1} parent=5 // pred_check_branch
        %185 = sbr.rel (%p182) target = $region12
      $region11: #{tpu_custom_call.1} parent=5 // pred_region
        %s186 = ssub.s32 %s15, 1
        // Predicated region
        $region13: #{tpu_custom_call.1} parent=11 // pred_check
          %p187 = pneg %p62
        $region14: #{tpu_custom_call.1} parent=11 // pred_check_branch
          %189 = sbr.rel (%p187) target = $region16
        $region15: #{tpu_custom_call.1} parent=11 // pred_region
          _
        $region16: #{tpu_custom_call.1} parent=11 // pred_fallthru
          _
        // Predicated region
        $region17: #{tpu_custom_call.1} parent=11 // pred_check
          %p190 = pneg %p83
        $region18: #{tpu_custom_call.1} parent=11 // pred_check_branch
          %192 = sbr.rel (%p190) target = $region20
        $region19: #{tpu_custom_call.1} parent=11 // pred_region
          _
        $region20: #{tpu_custom_call.1} parent=11 // pred_fallthru
          _
        // Predicated region
        $region21: #{tpu_custom_call.1} parent=11 // pred_check
          %p193 = pneg %p104
        $region22: #{tpu_custom_call.1} parent=11 // pred_check_branch
          %195 = sbr.rel (%p193) target = $region24
        $region23: #{tpu_custom_call.1} parent=11 // pred_region
          _
        $region24: #{tpu_custom_call.1} parent=11 // pred_fallthru
          _
        // Predicated region
        $region25: #{tpu_custom_call.1} parent=11 // pred_check
          %p196 = pneg %p125
        $region26: #{tpu_custom_call.1} parent=11 // pred_check_branch
          %198 = sbr.rel (%p196) target = $region28
        $region27: #{tpu_custom_call.1} parent=11 // pred_region
          _
        $region28: #{tpu_custom_call.1} parent=11 // pred_fallthru
          _
        // Predicated region
        $region29: #{tpu_custom_call.1} parent=11 // pred_check
          %p199 = pneg %p146
        $region30: #{tpu_custom_call.1} parent=11 // pred_check_branch
          %201 = sbr.rel (%p199) target = $region32
        $region31: #{tpu_custom_call.1} parent=11 // pred_region
          _
        $region32: #{tpu_custom_call.1} parent=11 // pred_fallthru
          _
      $region12: #{tpu_custom_call.1} parent=5 // pred_fallthru
        _
      %p202 = scmp.lt.s32.totalorder %s15, 2
      // Predicated region
      $region33: #{tpu_custom_call.1} parent=5 // pred_check
        %p203 = pneg %p202
      $region34: #{tpu_custom_call.1} parent=5 // pred_check_branch
        %205 = sbr.rel (%p203) target = $region36
      $region35: #{tpu_custom_call.1} parent=5 // pred_region
        // Predicated region
        $region37: #{tpu_custom_call.1} parent=35 // pred_check
          %p206 = pneg %p35
        $region38: #{tpu_custom_call.1} parent=35 // pred_check_branch
          %208 = sbr.rel (%p206) target = $region40
        $region39: #{tpu_custom_call.1} parent=35 // pred_region
          %s209 = smul.u32 16, %s15
          %p210 = scmp.lt.s32.totalorder %s209, 31
          %s211 = scalar_select %p210, %s209, 31
          %s212 = smul.addr %s211, 4
          %s213 = scalar_lea.vmem %s0, %s212
          %s214 = smul.u32 16, %s15
        $region40: #{tpu_custom_call.1} parent=35 // pred_fallthru
          _
      $region36: #{tpu_custom_call.1} parent=5 // pred_fallthru
        _
      %p215 = scmp.le.s32.totalorder 1, %s15
      %p216 = scmp.lt.s32.totalorder %s15, 3
      %p217 = pnand %p215, %p216
      %p218 = pneg %p217
      // Predicated region
      $region41: #{tpu_custom_call.1} parent=5 // pred_check
        _
      $region42: #{tpu_custom_call.1} parent=5 // pred_check_branch
        %220 = sbr.rel (%p217) target = $region44
      $region43: #{tpu_custom_call.1} parent=5 // pred_region
        %s221 = ssub.s32 %s15, 1
        %s222 = smul.u32 16, %s20
        %p223 = scmp.lt.s32.totalorder %s222, 31
        %s224 = scalar_select %p223, %s222, 31
        %s225 = smul.addr %s224, 4
        %s226 = scalar_lea.vmem %s0, %s225
        %p227 = pneg %p41
        %p228 = pneg %p38
        %p229 = pneg %p62
        %p230 = pneg %p59
        %p231 = pneg %p83
        %p232 = pneg %p80
        %p233 = pneg %p104
        %p234 = pneg %p101
        %p235 = pneg %p125
        %p236 = pneg %p122
        %p237 = pneg %p146
        %p238 = pneg %p143
        %p239 = pneg %p172
        %p240 = pneg %p169
        %s241 = sand.u32 %s159, 1
        %s242 = scalar_lea.sflag [#allocation3], %s241
        %s243 = sand.u32 %s159, 1
        %s244 = scalar_lea.vmem [#allocation2], %s243
        %s245 = smul.u32 16, %s20
        %p246 = scmp.lt.s32.totalorder %s245, 31
        %s247 = scalar_select %p246, %s245, 31
        %s248 = smul.addr %s247, 4
        %s249 = scalar_lea.vmem %s0, %s248
        %s250 = smul.u32 16, %s20
        %v252 = vld [vmem:[%s249] sm:$0xf]
        %v253 = vld [vmem:[%s249 + $0x4] sm:$0xf]
        %v254 = vld [vmem:[%s249 + $0x8] sm:$0xf]
        %v255 = vld [vmem:[%s249 + $0xc] sm:$0xf]
        %v256 = vld [vmem:[%s249 + $0x10] sm:$0xf]
        %v257 = vld [vmem:[%s249 + $0x14] sm:$0xf]
        %v258 = vld [vmem:[%s249 + $0x18] sm:$0xf]
        %v259 = vld [vmem:[%s249 + $0x1c] sm:$0xf]
        %v260 = vld [vmem:[%s249 + $0x20] sm:$0xf]
        %v261 = vld [vmem:[%s249 + $0x24] sm:$0xf]
        %v262 = vld [vmem:[%s249 + $0x28] sm:$0xf]
        %v263 = vld [vmem:[%s249 + $0x2c] sm:$0xf]
        %v264 = vld [vmem:[%s249 + $0x30] sm:$0xf]
        %v265 = vld [vmem:[%s249 + $0x34] sm:$0xf]
        %v266 = vld [vmem:[%s249 + $0x38] sm:$0xf]
        %v267 = vld [vmem:[%s249 + $0x3c] sm:$0xf]
        %v268 = vld [vmem:[%s1] sm:$0xf]
        %v269 = vld [vmem:[%s1 + $0x4] sm:$0xf]
        %v270 = vld [vmem:[%s1 + $0x8] sm:$0xf]
        %v271 = vld [vmem:[%s1 + $0xc] sm:$0xf]
        %v272 = vld [vmem:[%s1 + $0x10] sm:$0xf]
        %v273 = vld [vmem:[%s1 + $0x14] sm:$0xf]
        %v274 = vld [vmem:[%s1 + $0x18] sm:$0xf]
        %v275 = vld [vmem:[%s1 + $0x1c] sm:$0xf]
        %v276 = vld [vmem:[%s1 + $0x20] sm:$0xf]
        %v277 = vld [vmem:[%s1 + $0x24] sm:$0xf]
        %v278 = vld [vmem:[%s1 + $0x28] sm:$0xf]
        %v279 = vld [vmem:[%s1 + $0x2c] sm:$0xf]
        %v280 = vld [vmem:[%s1 + $0x30] sm:$0xf]
        %v281 = vld [vmem:[%s1 + $0x34] sm:$0xf]
        %v282 = vld [vmem:[%s1 + $0x38] sm:$0xf]
        %v283 = vld [vmem:[%s1 + $0x3c] sm:$0xf]
        %v284 = vld [vmem:[%s5] sm:$0xff]
        %v285 = vld [vmem:[%s5 + $0x8] sm:$0xff]
        %v286 = vld [vmem:[%s5 + $0x10] sm:$0xff]
        %v287 = vld [vmem:[%s5 + $0x18] sm:$0xff]
        %v288 = vld [vmem:[%s5 + $0x20] sm:$0xff]
        %v289 = vld [vmem:[%s5 + $0x28] sm:$0xff]
        %v290 = vld [vmem:[%s5 + $0x30] sm:$0xff]
        %v291 = vld [vmem:[%s5 + $0x38] sm:$0xff]
        %v292 = vld [vmem:[%s5 + $0x40] sm:$0xff]
        %v293 = vld [vmem:[%s5 + $0x48] sm:$0xff]
        %v294 = vld [vmem:[%s5 + $0x50] sm:$0xff]
        %v295 = vld [vmem:[%s5 + $0x58] sm:$0xff]
        %v296 = vld [vmem:[%s5 + $0x60] sm:$0xff]
        %v297 = vld [vmem:[%s5 + $0x68] sm:$0xff]
        %v298 = vld [vmem:[%s5 + $0x70] sm:$0xff]
        %v299 = vld [vmem:[%s5 + $0x78] sm:$0xff]
        %301 = vset.pattern.permute.xlu0 0
        %302 = vperm.xlu0 %301, %v284
        %v303 = vpop.permute.xlu0 %302
        %306 = vset.pattern.permute.xlu0 0
        %307 = vperm.xlu0 %306, %v285
        %v308 = vpop.permute.xlu0 %307
        %311 = vset.pattern.permute.xlu0 0
        %312 = vperm.xlu0 %311, %v286
        %v313 = vpop.permute.xlu0 %312
        %316 = vset.pattern.permute.xlu0 0
        %317 = vperm.xlu0 %316, %v287
        %v318 = vpop.permute.xlu0 %317
        %321 = vset.pattern.permute.xlu0 0
        %322 = vperm.xlu0 %321, %v288
        %v323 = vpop.permute.xlu0 %322
        %326 = vset.pattern.permute.xlu0 0
        %327 = vperm.xlu0 %326, %v289
        %v328 = vpop.permute.xlu0 %327
        %331 = vset.pattern.permute.xlu0 0
        %332 = vperm.xlu0 %331, %v290
        %v333 = vpop.permute.xlu0 %332
        %336 = vset.pattern.permute.xlu0 0
        %337 = vperm.xlu0 %336, %v291
        %v338 = vpop.permute.xlu0 %337
        %341 = vset.pattern.permute.xlu0 0
        %342 = vperm.xlu0 %341, %v292
        %v343 = vpop.permute.xlu0 %342
        %346 = vset.pattern.permute.xlu0 0
        %347 = vperm.xlu0 %346, %v293
        %v348 = vpop.permute.xlu0 %347
        %351 = vset.pattern.permute.xlu0 0
        %352 = vperm.xlu0 %351, %v294
        %v353 = vpop.permute.xlu0 %352
        %356 = vset.pattern.permute.xlu0 0
        %357 = vperm.xlu0 %356, %v295
        %v358 = vpop.permute.xlu0 %357
        %361 = vset.pattern.permute.xlu0 0
        %362 = vperm.xlu0 %361, %v296
        %v363 = vpop.permute.xlu0 %362
        %366 = vset.pattern.permute.xlu0 0
        %367 = vperm.xlu0 %366, %v297
        %v368 = vpop.permute.xlu0 %367
        %371 = vset.pattern.permute.xlu0 0
        %372 = vperm.xlu0 %371, %v298
        %v373 = vpop.permute.xlu0 %372
        %376 = vset.pattern.permute.xlu0 0
        %377 = vperm.xlu0 %376, %v299
        %v378 = vpop.permute.xlu0 %377
        %v396 = vunpack.c.l.b16 %v268
        %v397 = vunpack.c.l.b16 %v269
        %v398 = vunpack.c.l.b16 %v270
        %v399 = vunpack.c.l.b16 %v271
        %v400 = vunpack.c.l.b16 %v272
        %v401 = vunpack.c.l.b16 %v273
        %v402 = vunpack.c.l.b16 %v274
        %v403 = vunpack.c.l.b16 %v275
        %v404 = vunpack.c.l.b16 %v276
        %v405 = vunpack.c.l.b16 %v277
        %v406 = vunpack.c.l.b16 %v278
        %v407 = vunpack.c.l.b16 %v279
        %v408 = vunpack.c.l.b16 %v280
        %v409 = vunpack.c.l.b16 %v281
        %v410 = vunpack.c.l.b16 %v282
        %v411 = vunpack.c.l.b16 %v283
        %v412 = vpack.c.b16 %v397, %v396
        %v413 = vpack.c.b16 %v399, %v398
        %v414 = vpack.c.b16 %v401, %v400
        %v415 = vpack.c.b16 %v403, %v402
        %v416 = vpack.c.b16 %v405, %v404
        %v417 = vpack.c.b16 %v407, %v406
        %v418 = vpack.c.b16 %v409, %v408
        %v419 = vpack.c.b16 %v411, %v410
        %v436 = vunpack.c.l.b16 %v252
        %v437 = vunpack.c.l.b16 %v253
        %v438 = vunpack.c.l.b16 %v254
        %v439 = vunpack.c.l.b16 %v255
        %v440 = vunpack.c.l.b16 %v256
        %v441 = vunpack.c.l.b16 %v257
        %v442 = vunpack.c.l.b16 %v258
        %v443 = vunpack.c.l.b16 %v259
        %v444 = vunpack.c.l.b16 %v260
        %v445 = vunpack.c.l.b16 %v261
        %v446 = vunpack.c.l.b16 %v262
        %v447 = vunpack.c.l.b16 %v263
        %v448 = vunpack.c.l.b16 %v264
        %v449 = vunpack.c.l.b16 %v265
        %v450 = vunpack.c.l.b16 %v266
        %v451 = vunpack.c.l.b16 %v267
        %v452 = vpack.c.b16 %v437, %v436
        %v453 = vpack.c.b16 %v439, %v438
        %v454 = vpack.c.b16 %v441, %v440
        %v455 = vpack.c.b16 %v443, %v442
        %v456 = vpack.c.b16 %v445, %v444
        %v457 = vpack.c.b16 %v447, %v446
        %v458 = vpack.c.b16 %v449, %v448
        %v459 = vpack.c.b16 %v451, %v450
        %vm460 = vcmask 130048
        %v462 = vsel %vm460, %v412, 0
        %v465 = vsel %vm460, %v413, 0
        %v468 = vsel %vm460, %v414, 0
        %v471 = vsel %vm460, %v415, 0
        %v474 = vsel %vm460, %v416, 0
        %v477 = vsel %vm460, %v417, 0
        %v480 = vsel %vm460, %v418, 0
        %v483 = vsel %vm460, %v419, 0
        %v486 = vsel %vm460, %v452, 0
        %v489 = vsel %vm460, %v453, 0
        %v492 = vsel %vm460, %v454, 0
        %v495 = vsel %vm460, %v455, 0
        %v498 = vsel %vm460, %v456, 0
        %v501 = vsel %vm460, %v457, 0
        %v504 = vsel %vm460, %v458, 0
        %v507 = vsel %vm460, %v459, 0
        %509 = vmatprep.subr.bf16.mxu0 0
        %510 = vmatpush1.bf16.xpose.msra.mxu0 %v486
        %511 = vmatprep.subr.bf16.mxu0 0
        %512 = vmatpush1.bf16.xpose.msra.mxu0 %v489
        %513 = vmatprep.subr.bf16.mxu0 0
        %514 = vmatpush1.bf16.xpose.msra.mxu0 %v492
        %515 = vmatprep.subr.bf16.mxu0 0
        %516 = vmatpush1.bf16.xpose.msra.mxu0 %v495
        %517 = vmatprep.subr.bf16.mxu0 0
        %518 = vmatpush1.bf16.xpose.msra.mxu0 %v498
        %519 = vmatprep.subr.bf16.mxu0 0
        %520 = vmatpush1.bf16.xpose.msra.mxu0 %v501
        %521 = vmatprep.subr.bf16.mxu0 0
        %522 = vmatpush1.bf16.xpose.msra.mxu0 %v504
        %523 = vmatprep.subr.bf16.mxu0 0
        %524 = vmatpush1.bf16.xpose.msra.mxu0 %v507
        %525 = vmatprep.subr.bf16.mxu0 0
        %526 = vmatpush1.bf16.xpose.msra.mxu0 0
        %527 = vmatprep.subr.bf16.mxu0 0
        %528 = vmatpush1.bf16.xpose.msra.mxu0 0
        %529 = vmatprep.subr.bf16.mxu0 0
        %530 = vmatpush1.bf16.xpose.msra.mxu0 0
        %531 = vmatprep.subr.bf16.mxu0 0
        %532 = vmatpush1.bf16.xpose.msra.mxu0 0
        %533 = vmatprep.subr.bf16.mxu0 0
        %534 = vmatpush1.bf16.xpose.msra.mxu0 0
        %535 = vmatprep.subr.bf16.mxu0 0
        %536 = vmatpush1.bf16.xpose.msra.mxu0 0
        %537 = vmatprep.subr.bf16.mxu0 0
        %538 = vmatpush1.bf16.xpose.msra.mxu0 0
        %539 = vmatprep.subr.bf16.mxu0 0
        %540 = vmatpush1.bf16.xpose.msra.mxu0 0
        %541 = vmatprep.mubr.bf16.mxu0 0
        %542 = vmatmul.mubr.bf16.gmra.mrb[0].mxu0 %v462
        %v543 = vpop.f32.mrb[0].mxu0
        %v544 = vadd.f32 %v303, %v543
        %v545 = vpop.f32.mrb[0].mxu0
        %v546 = vpop.f32.mrb[0].mxu0
        %v547 = vadd.f32 %v308, %v546
        %v548 = vpop.f32.mrb[0].mxu0
        %549 = vmatprep.mubr.bf16.mxu0 0
        %550 = vmatmul.mubr.bf16.gmra.mrb[0].mxu0 %v465
        %v551 = vpop.f32.mrb[0].mxu0
        %v552 = vadd.f32 %v313, %v551
        %v553 = vpop.f32.mrb[0].mxu0
        %v554 = vpop.f32.mrb[0].mxu0
        %v555 = vadd.f32 %v318, %v554
        %v556 = vpop.f32.mrb[0].mxu0
        %557 = vmatprep.mubr.bf16.mxu0 0
        %558 = vmatmul.mubr.bf16.gmra.mrb[0].mxu0 %v468
        %v559 = vpop.f32.mrb[0].mxu0
        %v560 = vadd.f32 %v323, %v559
        %v561 = vpop.f32.mrb[0].mxu0
        %v562 = vpop.f32.mrb[0].mxu0
        %v563 = vadd.f32 %v328, %v562
        %v564 = vpop.f32.mrb[0].mxu0
        %565 = vmatprep.mubr.bf16.mxu0 0
        %566 = vmatmul.mubr.bf16.gmra.mrb[0].mxu0 %v471
        %v567 = vpop.f32.mrb[0].mxu0
        %v568 = vadd.f32 %v333, %v567
        %v569 = vpop.f32.mrb[0].mxu0
        %v570 = vpop.f32.mrb[0].mxu0
        %v571 = vadd.f32 %v338, %v570
        %v572 = vpop.f32.mrb[0].mxu0
        %573 = vmatprep.mubr.bf16.mxu0 0
        %574 = vmatmul.mubr.bf16.gmra.mrb[0].mxu0 %v474
        %v575 = vpop.f32.mrb[0].mxu0
        %v576 = vadd.f32 %v343, %v575
        %v577 = vpop.f32.mrb[0].mxu0
        %v578 = vpop.f32.mrb[0].mxu0
        %v579 = vadd.f32 %v348, %v578
        %v580 = vpop.f32.mrb[0].mxu0
        %581 = vmatprep.mubr.bf16.mxu0 0
        %582 = vmatmul.mubr.bf16.gmra.mrb[0].mxu0 %v477
        %v583 = vpop.f32.mrb[0].mxu0
        %v584 = vadd.f32 %v353, %v583
        %v585 = vpop.f32.mrb[0].mxu0
        %v586 = vpop.f32.mrb[0].mxu0
        %v587 = vadd.f32 %v358, %v586
        %v588 = vpop.f32.mrb[0].mxu0
        %589 = vmatprep.mubr.bf16.mxu0 0
        %590 = vmatmul.mubr.bf16.gmra.mrb[0].mxu0 %v480
        %v591 = vpop.f32.mrb[0].mxu0
        %v592 = vadd.f32 %v363, %v591
        %v593 = vpop.f32.mrb[0].mxu0
        %v594 = vpop.f32.mrb[0].mxu0
        %v595 = vadd.f32 %v368, %v594
        %v596 = vpop.f32.mrb[0].mxu0
        %597 = vmatprep.mubr.bf16.mxu0 0
        %598 = vmatmul.mubr.bf16.gmra.mrb[0].mxu0 %v483
        %v599 = vpop.f32.mrb[0].mxu0
        %v600 = vadd.f32 %v373, %v599
        %v601 = vpop.f32.mrb[0].mxu0
        %v602 = vpop.f32.mrb[0].mxu0
        %v603 = vadd.f32 %v378, %v602
        %v604 = vpop.f32.mrb[0].mxu0
        %605 = vdwg.mxu0
        %v606 = vmax.f32 %v544, 0.0
        %v607 = vmax.f32 %v547, 0.0
        %v608 = vmax.f32 %v552, 0.0
        %v609 = vmax.f32 %v555, 0.0
        %v610 = vmax.f32 %v560, 0.0
        %v611 = vmax.f32 %v563, 0.0
        %v612 = vmax.f32 %v568, 0.0
        %v613 = vmax.f32 %v571, 0.0
        %v614 = vmax.f32 %v576, 0.0
        %v615 = vmax.f32 %v579, 0.0
        %v616 = vmax.f32 %v584, 0.0
        %v617 = vmax.f32 %v587, 0.0
        %v618 = vmax.f32 %v592, 0.0
        %v619 = vmax.f32 %v595, 0.0
        %v620 = vmax.f32 %v600, 0.0
        %v621 = vmax.f32 %v603, 0.0
        %v622 = vpack.c.bf16 %v607, %v606
        %v623 = vpack.c.bf16 %v609, %v608
        %v624 = vpack.c.bf16 %v611, %v610
        %v625 = vpack.c.bf16 %v613, %v612
        %v626 = vpack.c.bf16 %v615, %v614
        %v627 = vpack.c.bf16 %v617, %v616
        %v628 = vpack.c.bf16 %v619, %v618
        %v629 = vpack.c.bf16 %v621, %v620
        %v630 = vld [vmem:[%s2] sm:$0xf]
        %v631 = vld [vmem:[%s2 + $0x4] sm:$0xf]
        %v632 = vld [vmem:[%s2 + $0x8] sm:$0xf]
        %v633 = vld [vmem:[%s2 + $0xc] sm:$0xf]
        %v634 = vld [vmem:[%s2 + $0x10] sm:$0xf]
        %v635 = vld [vmem:[%s2 + $0x14] sm:$0xf]
        %v636 = vld [vmem:[%s2 + $0x18] sm:$0xf]
        %v637 = vld [vmem:[%s2 + $0x1c] sm:$0xf]
        %v638 = vld [vmem:[%s2 + $0x20] sm:$0xf]
        %v639 = vld [vmem:[%s2 + $0x24] sm:$0xf]
        %v640 = vld [vmem:[%s2 + $0x28] sm:$0xf]
        %v641 = vld [vmem:[%s2 + $0x2c] sm:$0xf]
        %v642 = vld [vmem:[%s2 + $0x30] sm:$0xf]
        %v643 = vld [vmem:[%s2 + $0x34] sm:$0xf]
        %v644 = vld [vmem:[%s2 + $0x38] sm:$0xf]
        %v645 = vld [vmem:[%s2 + $0x3c] sm:$0xf]
        %646 = vset.pattern.permute.xlu0 1
        %647 = vperm.xlu0 %646, %v284
        %v648 = vpop.permute.xlu0 %647
        %650 = vset.pattern.permute.xlu0 1
        %651 = vperm.xlu0 %650, %v285
        %v652 = vpop.permute.xlu0 %651
        %654 = vset.pattern.permute.xlu0 1
        %655 = vperm.xlu0 %654, %v286
        %v656 = vpop.permute.xlu0 %655
        %658 = vset.pattern.permute.xlu0 1
        %659 = vperm.xlu0 %658, %v287
        %v660 = vpop.permute.xlu0 %659
        %662 = vset.pattern.permute.xlu0 1
        %663 = vperm.xlu0 %662, %v288
        %v664 = vpop.permute.xlu0 %663
        %666 = vset.pattern.permute.xlu0 1
        %667 = vperm.xlu0 %666, %v289
        %v668 = vpop.permute.xlu0 %667
        %670 = vset.pattern.permute.xlu0 1
        %671 = vperm.xlu0 %670, %v290
        %v672 = vpop.permute.xlu0 %671
        %674 = vset.pattern.permute.xlu0 1
        %675 = vperm.xlu0 %674, %v291
        %v676 = vpop.permute.xlu0 %675
        %678 = vset.pattern.permute.xlu0 1
        %679 = vperm.xlu0 %678, %v292
        %v680 = vpop.permute.xlu0 %679
        %682 = vset.pattern.permute.xlu0 1
        %683 = vperm.xlu0 %682, %v293
        %v684 = vpop.permute.xlu0 %683
        %686 = vset.pattern.permute.xlu0 1
        %687 = vperm.xlu0 %686, %v294
        %v688 = vpop.permute.xlu0 %687
        %690 = vset.pattern.permute.xlu0 1
        %691 = vperm.xlu0 %690, %v295
        %v692 = vpop.permute.xlu0 %691
        %694 = vset.pattern.permute.xlu0 1
        %695 = vperm.xlu0 %694, %v296
        %v696 = vpop.permute.xlu0 %695
        %698 = vset.pattern.permute.xlu0 1
        %699 = vperm.xlu0 %698, %v297
        %v700 = vpop.permute.xlu0 %699
        %702 = vset.pattern.permute.xlu0 1
        %703 = vperm.xlu0 %702, %v298
        %v704 = vpop.permute.xlu0 %703
        %706 = vset.pattern.permute.xlu0 1
        %707 = vperm.xlu0 %706, %v299
        %v708 = vpop.permute.xlu0 %707
        %v726 = vunpack.c.l.b16 %v630
        %v727 = vunpack.c.l.b16 %v631
        %v728 = vunpack.c.l.b16 %v632
        %v729 = vunpack.c.l.b16 %v633
        %v730 = vunpack.c.l.b16 %v634
        %v731 = vunpack.c.l.b16 %v635
        %v732 = vunpack.c.l.b16 %v636
        %v733 = vunpack.c.l.b16 %v637
        %v734 = vunpack.c.l.b16 %v638
        %v735 = vunpack.c.l.b16 %v639
        %v736 = vunpack.c.l.b16 %v640
        %v737 = vunpack.c.l.b16 %v641
        %v738 = vunpack.c.l.b16 %v642
        %v739 = vunpack.c.l.b16 %v643
        %v740 = vunpack.c.l.b16 %v644
        %v741 = vunpack.c.l.b16 %v645
        %v742 = vpack.c.b16 %v727, %v726
        %v743 = vpack.c.b16 %v729, %v728
        %v744 = vpack.c.b16 %v731, %v730
        %v745 = vpack.c.b16 %v733, %v732
        %v746 = vpack.c.b16 %v735, %v734
        %v747 = vpack.c.b16 %v737, %v736
        %v748 = vpack.c.b16 %v739, %v738
        %v749 = vpack.c.b16 %v741, %v740
        %758 = vmatprep.subr.bf16.mxu0 0
        %759 = vmatpush1.bf16.msra.mxu0 %v622
        %760 = vmatprep.subr.bf16.mxu0 0
        %761 = vmatpush1.bf16.msra.mxu0 %v623
        %762 = vmatprep.subr.bf16.mxu0 0
        %763 = vmatpush1.bf16.msra.mxu0 %v624
        %764 = vmatprep.subr.bf16.mxu0 0
        %765 = vmatpush1.bf16.msra.mxu0 %v625
        %766 = vmatprep.subr.bf16.mxu0 0
        %767 = vmatpush1.bf16.msra.mxu0 %v626
        %768 = vmatprep.subr.bf16.mxu0 0
        %769 = vmatpush1.bf16.msra.mxu0 %v627
        %770 = vmatprep.subr.bf16.mxu0 0
        %771 = vmatpush1.bf16.msra.mxu0 %v628
        %772 = vmatprep.subr.bf16.mxu0 0
        %773 = vmatpush1.bf16.msra.mxu0 %v629
        %774 = vmatprep.subr.bf16.mxu0 0
        %775 = vmatpush1.bf16.msra.mxu0 0
        %776 = vmatprep.subr.bf16.mxu0 0
        %777 = vmatpush1.bf16.msra.mxu0 0
        %778 = vmatprep.subr.bf16.mxu0 0
        %779 = vmatpush1.bf16.msra.mxu0 0
        %780 = vmatprep.subr.bf16.mxu0 0
        %781 = vmatpush1.bf16.msra.mxu0 0
        %782 = vmatprep.subr.bf16.mxu0 0
        %783 = vmatpush1.bf16.msra.mxu0 0
        %784 = vmatprep.subr.bf16.mxu0 0
        %785 = vmatpush1.bf16.msra.mxu0 0
        %786 = vmatprep.subr.bf16.mxu0 0
        %787 = vmatpush1.bf16.msra.mxu0 0
        %788 = vmatprep.subr.bf16.mxu0 0
        %789 = vmatpush1.bf16.msra.mxu0 0
        %790 = vmatprep.mubr.bf16.mxu0 0
        %791 = vmatmul.mubr.bf16.gmra.mrb[0].mxu0 %v742
        %v792 = vpop.f32.mrb[0].mxu0
        %v793 = vadd.f32 %v648, %v792
        %v794 = vpop.f32.mrb[0].mxu0
        %v795 = vpop.f32.mrb[0].mxu0
        %v796 = vadd.f32 %v652, %v795
        %v797 = vpop.f32.mrb[0].mxu0
        %798 = vmatprep.mubr.bf16.mxu0 0
        %799 = vmatmul.mubr.bf16.gmra.mrb[0].mxu0 %v743
        %v800 = vpop.f32.mrb[0].mxu0
        %v801 = vadd.f32 %v656, %v800
        %v802 = vpop.f32.mrb[0].mxu0
        %v803 = vpop.f32.mrb[0].mxu0
        %v804 = vadd.f32 %v660, %v803
        %v805 = vpop.f32.mrb[0].mxu0
        %806 = vmatprep.mubr.bf16.mxu0 0
        %807 = vmatmul.mubr.bf16.gmra.mrb[0].mxu0 %v744
        %v808 = vpop.f32.mrb[0].mxu0
        %v809 = vadd.f32 %v664, %v808
        %v810 = vpop.f32.mrb[0].mxu0
        %v811 = vpop.f32.mrb[0].mxu0
        %v812 = vadd.f32 %v668, %v811
        %v813 = vpop.f32.mrb[0].mxu0
        %814 = vmatprep.mubr.bf16.mxu0 0
        %815 = vmatmul.mubr.bf16.gmra.mrb[0].mxu0 %v745
        %v816 = vpop.f32.mrb[0].mxu0
        %v817 = vadd.f32 %v672, %v816
        %v818 = vpop.f32.mrb[0].mxu0
        %v819 = vpop.f32.mrb[0].mxu0
        %v820 = vadd.f32 %v676, %v819
        %v821 = vpop.f32.mrb[0].mxu0
        %822 = vmatprep.mubr.bf16.mxu0 0
        %823 = vmatmul.mubr.bf16.gmra.mrb[0].mxu0 %v746
        %v824 = vpop.f32.mrb[0].mxu0
        %v825 = vadd.f32 %v680, %v824
        %v826 = vpop.f32.mrb[0].mxu0
        %v827 = vpop.f32.mrb[0].mxu0
        %v828 = vadd.f32 %v684, %v827
        %v829 = vpop.f32.mrb[0].mxu0
        %830 = vmatprep.mubr.bf16.mxu0 0
        %831 = vmatmul.mubr.bf16.gmra.mrb[0].mxu0 %v747
        %v832 = vpop.f32.mrb[0].mxu0
        %v833 = vadd.f32 %v688, %v832
        %v834 = vpop.f32.mrb[0].mxu0
        %v835 = vpop.f32.mrb[0].mxu0
        %v836 = vadd.f32 %v692, %v835
        %v837 = vpop.f32.mrb[0].mxu0
        %838 = vmatprep.mubr.bf16.mxu0 0
        %839 = vmatmul.mubr.bf16.gmra.mrb[0].mxu0 %v748
        %v840 = vpop.f32.mrb[0].mxu0
        %v841 = vadd.f32 %v696, %v840
        %v842 = vpop.f32.mrb[0].mxu0
        %v843 = vpop.f32.mrb[0].mxu0
        %v844 = vadd.f32 %v700, %v843
        %v845 = vpop.f32.mrb[0].mxu0
        %846 = vmatprep.mubr.bf16.mxu0 0
        %847 = vmatmul.mubr.bf16.gmra.mrb[0].mxu0 %v749
        %v848 = vpop.f32.mrb[0].mxu0
        %v849 = vadd.f32 %v704, %v848
        %v850 = vpop.f32.mrb[0].mxu0
        %v851 = vpop.f32.mrb[0].mxu0
        %v852 = vadd.f32 %v708, %v851
        %v853 = vpop.f32.mrb[0].mxu0
        %854 = vdwg.mxu0
        %v855 = vmax.f32 %v793, 0.0
        %v856 = vmax.f32 %v796, 0.0
        %v857 = vmax.f32 %v801, 0.0
        %v858 = vmax.f32 %v804, 0.0
        %v859 = vmax.f32 %v809, 0.0
        %v860 = vmax.f32 %v812, 0.0
        %v861 = vmax.f32 %v817, 0.0
        %v862 = vmax.f32 %v820, 0.0
        %v863 = vmax.f32 %v825, 0.0
        %v864 = vmax.f32 %v828, 0.0
        %v865 = vmax.f32 %v833, 0.0
        %v866 = vmax.f32 %v836, 0.0
        %v867 = vmax.f32 %v841, 0.0
        %v868 = vmax.f32 %v844, 0.0
        %v869 = vmax.f32 %v849, 0.0
        %v870 = vmax.f32 %v852, 0.0
        %v871 = vpack.c.bf16 %v856, %v855
        %v872 = vpack.c.bf16 %v858, %v857
        %v873 = vpack.c.bf16 %v860, %v859
        %v874 = vpack.c.bf16 %v862, %v861
        %v875 = vpack.c.bf16 %v864, %v863
        %v876 = vpack.c.bf16 %v866, %v865
        %v877 = vpack.c.bf16 %v868, %v867
        %v878 = vpack.c.bf16 %v870, %v869
        %v879 = vld [vmem:[%s3] sm:$0xf]
        %v880 = vld [vmem:[%s3 + $0x4] sm:$0xf]
        %v881 = vld [vmem:[%s3 + $0x8] sm:$0xf]
        %v882 = vld [vmem:[%s3 + $0xc] sm:$0xf]
        %v883 = vld [vmem:[%s3 + $0x10] sm:$0xf]
        %v884 = vld [vmem:[%s3 + $0x14] sm:$0xf]
        %v885 = vld [vmem:[%s3 + $0x18] sm:$0xf]
        %v886 = vld [vmem:[%s3 + $0x1c] sm:$0xf]
        %v887 = vld [vmem:[%s3 + $0x20] sm:$0xf]
        %v888 = vld [vmem:[%s3 + $0x24] sm:$0xf]
        %v889 = vld [vmem:[%s3 + $0x28] sm:$0xf]
        %v890 = vld [vmem:[%s3 + $0x2c] sm:$0xf]
        %v891 = vld [vmem:[%s3 + $0x30] sm:$0xf]
        %v892 = vld [vmem:[%s3 + $0x34] sm:$0xf]
        %v893 = vld [vmem:[%s3 + $0x38] sm:$0xf]
        %v894 = vld [vmem:[%s3 + $0x3c] sm:$0xf]
        %895 = vset.pattern.permute.xlu0 2
        %896 = vperm.xlu0 %895, %v284
        %v897 = vpop.permute.xlu0 %896
        %899 = vset.pattern.permute.xlu0 2
        %900 = vperm.xlu0 %899, %v285
        %v901 = vpop.permute.xlu0 %900
        %903 = vset.pattern.permute.xlu0 2
        %904 = vperm.xlu0 %903, %v286
        %v905 = vpop.permute.xlu0 %904
        %907 = vset.pattern.permute.xlu0 2
        %908 = vperm.xlu0 %907, %v287
        %v909 = vpop.permute.xlu0 %908
        %911 = vset.pattern.permute.xlu0 2
        %912 = vperm.xlu0 %911, %v288
        %v913 = vpop.permute.xlu0 %912
        %915 = vset.pattern.permute.xlu0 2
        %916 = vperm.xlu0 %915, %v289
        %v917 = vpop.permute.xlu0 %916
        %919 = vset.pattern.permute.xlu0 2
        %920 = vperm.xlu0 %919, %v290
        %v921 = vpop.permute.xlu0 %920
        %923 = vset.pattern.permute.xlu0 2
        %924 = vperm.xlu0 %923, %v291
        %v925 = vpop.permute.xlu0 %924
        %927 = vset.pattern.permute.xlu0 2
        %928 = vperm.xlu0 %927, %v292
        %v929 = vpop.permute.xlu0 %928
        %931 = vset.pattern.permute.xlu0 2
        %932 = vperm.xlu0 %931, %v293
        %v933 = vpop.permute.xlu0 %932
        %935 = vset.pattern.permute.xlu0 2
        %936 = vperm.xlu0 %935, %v294
        %v937 = vpop.permute.xlu0 %936
        %939 = vset.pattern.permute.xlu0 2
        %940 = vperm.xlu0 %939, %v295
        %v941 = vpop.permute.xlu0 %940
        %943 = vset.pattern.permute.xlu0 2
        %944 = vperm.xlu0 %943, %v296
        %v945 = vpop.permute.xlu0 %944
        %947 = vset.pattern.permute.xlu0 2
        %948 = vperm.xlu0 %947, %v297
        %v949 = vpop.permute.xlu0 %948
        %951 = vset.pattern.permute.xlu0 2
        %952 = vperm.xlu0 %951, %v298
        %v953 = vpop.permute.xlu0 %952
        %955 = vset.pattern.permute.xlu0 2
        %956 = vperm.xlu0 %955, %v299
        %v957 = vpop.permute.xlu0 %956
        %v975 = vunpack.c.l.b16 %v879
        %v976 = vunpack.c.l.b16 %v880
        %v977 = vunpack.c.l.b16 %v881
        %v978 = vunpack.c.l.b16 %v882
        %v979 = vunpack.c.l.b16 %v883
        %v980 = vunpack.c.l.b16 %v884
        %v981 = vunpack.c.l.b16 %v885
        %v982 = vunpack.c.l.b16 %v886
        %v983 = vunpack.c.l.b16 %v887
        %v984 = vunpack.c.l.b16 %v888
        %v985 = vunpack.c.l.b16 %v889
        %v986 = vunpack.c.l.b16 %v890
        %v987 = vunpack.c.l.b16 %v891
        %v988 = vunpack.c.l.b16 %v892
        %v989 = vunpack.c.l.b16 %v893
        %v990 = vunpack.c.l.b16 %v894
        %v991 = vpack.c.b16 %v976, %v975
        %v992 = vpack.c.b16 %v978, %v977
        %v993 = vpack.c.b16 %v980, %v979
        %v994 = vpack.c.b16 %v982, %v981
        %v995 = vpack.c.b16 %v984, %v983
        %v996 = vpack.c.b16 %v986, %v985
        %v997 = vpack.c.b16 %v988, %v987
        %v998 = vpack.c.b16 %v990, %v989
        %1007 = vmatprep.subr.bf16.mxu0 0
        %1008 = vmatpush1.bf16.msra.mxu0 %v871
        %1009 = vmatprep.subr.bf16.mxu0 0
        %1010 = vmatpush1.bf16.msra.mxu0 %v872
        %1011 = vmatprep.subr.bf16.mxu0 0
        %1012 = vmatpush1.bf16.msra.mxu0 %v873
        %1013 = vmatprep.subr.bf16.mxu0 0
        %1014 = vmatpush1.bf16.msra.mxu0 %v874
        %1015 = vmatprep.subr.bf16.mxu0 0
        %1016 = vmatpush1.bf16.msra.mxu0 %v875
        %1017 = vmatprep.subr.bf16.mxu0 0
        %1018 = vmatpush1.bf16.msra.mxu0 %v876
        %1019 = vmatprep.subr.bf16.mxu0 0
        %1020 = vmatpush1.bf16.msra.mxu0 %v877
        %1021 = vmatprep.subr.bf16.mxu0 0
        %1022 = vmatpush1.bf16.msra.mxu0 %v878
        %1023 = vmatprep.subr.bf16.mxu0 0
        %1024 = vmatpush1.bf16.msra.mxu0 0
        %1025 = vmatprep.subr.bf16.mxu0 0
        %1026 = vmatpush1.bf16.msra.mxu0 0
        %1027 = vmatprep.subr.bf16.mxu0 0
        %1028 = vmatpush1.bf16.msra.mxu0 0
        %1029 = vmatprep.subr.bf16.mxu0 0
        %1030 = vmatpush1.bf16.msra.mxu0 0
        %1031 = vmatprep.subr.bf16.mxu0 0
        %1032 = vmatpush1.bf16.msra.mxu0 0
        %1033 = vmatprep.subr.bf16.mxu0 0
        %1034 = vmatpush1.bf16.msra.mxu0 0
        %1035 = vmatprep.subr.bf16.mxu0 0
        %1036 = vmatpush1.bf16.msra.mxu0 0
        %1037 = vmatprep.subr.bf16.mxu0 0
        %1038 = vmatpush1.bf16.msra.mxu0 0
        %1039 = vmatprep.mubr.bf16.mxu0 0
        %1040 = vmatmul.mubr.bf16.gmra.mrb[0].mxu0 %v991
        %v1041 = vpop.f32.mrb[0].mxu0
        %v1042 = vadd.f32 %v897, %v1041
        %v1043 = vpop.f32.mrb[0].mxu0
        %v1044 = vpop.f32.mrb[0].mxu0
        %v1045 = vadd.f32 %v901, %v1044
        %v1046 = vpop.f32.mrb[0].mxu0
        %1047 = vmatprep.mubr.bf16.mxu0 0
        %1048 = vmatmul.mubr.bf16.gmra.mrb[0].mxu0 %v992
        %v1049 = vpop.f32.mrb[0].mxu0
        %v1050 = vadd.f32 %v905, %v1049
        %v1051 = vpop.f32.mrb[0].mxu0
        %v1052 = vpop.f32.mrb[0].mxu0
        %v1053 = vadd.f32 %v909, %v1052
        %v1054 = vpop.f32.mrb[0].mxu0
        %1055 = vmatprep.mubr.bf16.mxu0 0
        %1056 = vmatmul.mubr.bf16.gmra.mrb[0].mxu0 %v993
        %v1057 = vpop.f32.mrb[0].mxu0
        %v1058 = vadd.f32 %v913, %v1057
        %v1059 = vpop.f32.mrb[0].mxu0
        %v1060 = vpop.f32.mrb[0].mxu0
        %v1061 = vadd.f32 %v917, %v1060
        %v1062 = vpop.f32.mrb[0].mxu0
        %1063 = vmatprep.mubr.bf16.mxu0 0
        %1064 = vmatmul.mubr.bf16.gmra.mrb[0].mxu0 %v994
        %v1065 = vpop.f32.mrb[0].mxu0
        %v1066 = vadd.f32 %v921, %v1065
        %v1067 = vpop.f32.mrb[0].mxu0
        %v1068 = vpop.f32.mrb[0].mxu0
        %v1069 = vadd.f32 %v925, %v1068
        %v1070 = vpop.f32.mrb[0].mxu0
        %1071 = vmatprep.mubr.bf16.mxu0 0
        %1072 = vmatmul.mubr.bf16.gmra.mrb[0].mxu0 %v995
        %v1073 = vpop.f32.mrb[0].mxu0
        %v1074 = vadd.f32 %v929, %v1073
        %v1075 = vpop.f32.mrb[0].mxu0
        %v1076 = vpop.f32.mrb[0].mxu0
        %v1077 = vadd.f32 %v933, %v1076
        %v1078 = vpop.f32.mrb[0].mxu0
        %1079 = vmatprep.mubr.bf16.mxu0 0
        %1080 = vmatmul.mubr.bf16.gmra.mrb[0].mxu0 %v996
        %v1081 = vpop.f32.mrb[0].mxu0
        %v1082 = vadd.f32 %v937, %v1081
        %v1083 = vpop.f32.mrb[0].mxu0
        %v1084 = vpop.f32.mrb[0].mxu0
        %v1085 = vadd.f32 %v941, %v1084
        %v1086 = vpop.f32.mrb[0].mxu0
        %1087 = vmatprep.mubr.bf16.mxu0 0
        %1088 = vmatmul.mubr.bf16.gmra.mrb[0].mxu0 %v997
        %v1089 = vpop.f32.mrb[0].mxu0
        %v1090 = vadd.f32 %v945, %v1089
        %v1091 = vpop.f32.mrb[0].mxu0
        %v1092 = vpop.f32.mrb[0].mxu0
        %v1093 = vadd.f32 %v949, %v1092
        %v1094 = vpop.f32.mrb[0].mxu0
        %1095 = vmatprep.mubr.bf16.mxu0 0
        %1096 = vmatmul.mubr.bf16.gmra.mrb[0].mxu0 %v998
        %v1097 = vpop.f32.mrb[0].mxu0
        %v1098 = vadd.f32 %v953, %v1097
        %v1099 = vpop.f32.mrb[0].mxu0
        %v1100 = vpop.f32.mrb[0].mxu0
        %v1101 = vadd.f32 %v957, %v1100
        %v1102 = vpop.f32.mrb[0].mxu0
        %1103 = vdwg.mxu0
        %v1104 = vmax.f32 %v1042, 0.0
        %v1105 = vmax.f32 %v1045, 0.0
        %v1106 = vmax.f32 %v1050, 0.0
        %v1107 = vmax.f32 %v1053, 0.0
        %v1108 = vmax.f32 %v1058, 0.0
        %v1109 = vmax.f32 %v1061, 0.0
        %v1110 = vmax.f32 %v1066, 0.0
        %v1111 = vmax.f32 %v1069, 0.0
        %v1112 = vmax.f32 %v1074, 0.0
        %v1113 = vmax.f32 %v1077, 0.0
        %v1114 = vmax.f32 %v1082, 0.0
        %v1115 = vmax.f32 %v1085, 0.0
        %v1116 = vmax.f32 %v1090, 0.0
        %v1117 = vmax.f32 %v1093, 0.0
        %v1118 = vmax.f32 %v1098, 0.0
        %v1119 = vmax.f32 %v1101, 0.0
        %v1120 = vpack.c.bf16 %v1105, %v1104
        %v1121 = vpack.c.bf16 %v1107, %v1106
        %v1122 = vpack.c.bf16 %v1109, %v1108
        %v1123 = vpack.c.bf16 %v1111, %v1110
        %v1124 = vpack.c.bf16 %v1113, %v1112
        %v1125 = vpack.c.bf16 %v1115, %v1114
        %v1126 = vpack.c.bf16 %v1117, %v1116
        %v1127 = vpack.c.bf16 %v1119, %v1118
        %v1128 = vld [vmem:[%s4] sm:$0xf]
        %v1129 = vld [vmem:[%s4 + $0x4] sm:$0xf]
        %v1130 = vld [vmem:[%s4 + $0x8] sm:$0xf]
        %v1131 = vld [vmem:[%s4 + $0xc] sm:$0xf]
        %v1132 = vld [vmem:[%s4 + $0x10] sm:$0xf]
        %v1133 = vld [vmem:[%s4 + $0x14] sm:$0xf]
        %v1134 = vld [vmem:[%s4 + $0x18] sm:$0xf]
        %v1135 = vld [vmem:[%s4 + $0x1c] sm:$0xf]
        %v1136 = vld [vmem:[%s4 + $0x20] sm:$0xf]
        %v1137 = vld [vmem:[%s4 + $0x24] sm:$0xf]
        %v1138 = vld [vmem:[%s4 + $0x28] sm:$0xf]
        %v1139 = vld [vmem:[%s4 + $0x2c] sm:$0xf]
        %v1140 = vld [vmem:[%s4 + $0x30] sm:$0xf]
        %v1141 = vld [vmem:[%s4 + $0x34] sm:$0xf]
        %v1142 = vld [vmem:[%s4 + $0x38] sm:$0xf]
        %v1143 = vld [vmem:[%s4 + $0x3c] sm:$0xf]
        %1144 = vset.pattern.permute.xlu0 3
        %1145 = vperm.xlu0 %1144, %v284
        %v1146 = vpop.permute.xlu0 %1145
        %1148 = vset.pattern.permute.xlu0 3
        %1149 = vperm.xlu0 %1148, %v285
        %v1150 = vpop.permute.xlu0 %1149
        %1152 = vset.pattern.permute.xlu0 3
        %1153 = vperm.xlu0 %1152, %v286
        %v1154 = vpop.permute.xlu0 %1153
        %1156 = vset.pattern.permute.xlu0 3
        %1157 = vperm.xlu0 %1156, %v287
        %v1158 = vpop.permute.xlu0 %1157
        %1160 = vset.pattern.permute.xlu0 3
        %1161 = vperm.xlu0 %1160, %v288
        %v1162 = vpop.permute.xlu0 %1161
        %1164 = vset.pattern.permute.xlu0 3
        %1165 = vperm.xlu0 %1164, %v289
        %v1166 = vpop.permute.xlu0 %1165
        %1168 = vset.pattern.permute.xlu0 3
        %1169 = vperm.xlu0 %1168, %v290
        %v1170 = vpop.permute.xlu0 %1169
        %1172 = vset.pattern.permute.xlu0 3
        %1173 = vperm.xlu0 %1172, %v291
        %v1174 = vpop.permute.xlu0 %1173
        %1176 = vset.pattern.permute.xlu0 3
        %1177 = vperm.xlu0 %1176, %v292
        %v1178 = vpop.permute.xlu0 %1177
        %1180 = vset.pattern.permute.xlu0 3
        %1181 = vperm.xlu0 %1180, %v293
        %v1182 = vpop.permute.xlu0 %1181
        %1184 = vset.pattern.permute.xlu0 3
        %1185 = vperm.xlu0 %1184, %v294
        %v1186 = vpop.permute.xlu0 %1185
        %1188 = vset.pattern.permute.xlu0 3
        %1189 = vperm.xlu0 %1188, %v295
        %v1190 = vpop.permute.xlu0 %1189
        %1192 = vset.pattern.permute.xlu0 3
        %1193 = vperm.xlu0 %1192, %v296
        %v1194 = vpop.permute.xlu0 %1193
        %1196 = vset.pattern.permute.xlu0 3
        %1197 = vperm.xlu0 %1196, %v297
        %v1198 = vpop.permute.xlu0 %1197
        %1200 = vset.pattern.permute.xlu0 3
        %1201 = vperm.xlu0 %1200, %v298
        %v1202 = vpop.permute.xlu0 %1201
        %1204 = vset.pattern.permute.xlu0 3
        %1205 = vperm.xlu0 %1204, %v299
        %v1206 = vpop.permute.xlu0 %1205
        %v1224 = vunpack.c.l.b16 %v1128
        %v1225 = vunpack.c.l.b16 %v1129
        %v1226 = vunpack.c.l.b16 %v1130
        %v1227 = vunpack.c.l.b16 %v1131
        %v1228 = vunpack.c.l.b16 %v1132
        %v1229 = vunpack.c.l.b16 %v1133
        %v1230 = vunpack.c.l.b16 %v1134
        %v1231 = vunpack.c.l.b16 %v1135
        %v1232 = vunpack.c.l.b16 %v1136
        %v1233 = vunpack.c.l.b16 %v1137
        %v1234 = vunpack.c.l.b16 %v1138
        %v1235 = vunpack.c.l.b16 %v1139
        %v1236 = vunpack.c.l.b16 %v1140
        %v1237 = vunpack.c.l.b16 %v1141
        %v1238 = vunpack.c.l.b16 %v1142
        %v1239 = vunpack.c.l.b16 %v1143
        %v1240 = vpack.c.b16 %v1225, %v1224
        %v1241 = vpack.c.b16 %v1227, %v1226
        %v1242 = vpack.c.b16 %v1229, %v1228
        %v1243 = vpack.c.b16 %v1231, %v1230
        %v1244 = vpack.c.b16 %v1233, %v1232
        %v1245 = vpack.c.b16 %v1235, %v1234
        %v1246 = vpack.c.b16 %v1237, %v1236
        %v1247 = vpack.c.b16 %v1239, %v1238
        %1256 = vmatprep.subr.bf16.mxu0 0
        %1257 = vmatpush1.bf16.msra.mxu0 %v1120
        %1258 = vmatprep.subr.bf16.mxu0 0
        %1259 = vmatpush1.bf16.msra.mxu0 %v1121
        %1260 = vmatprep.subr.bf16.mxu0 0
        %1261 = vmatpush1.bf16.msra.mxu0 %v1122
        %1262 = vmatprep.subr.bf16.mxu0 0
        %1263 = vmatpush1.bf16.msra.mxu0 %v1123
        %1264 = vmatprep.subr.bf16.mxu0 0
        %1265 = vmatpush1.bf16.msra.mxu0 %v1124
        %1266 = vmatprep.subr.bf16.mxu0 0
        %1267 = vmatpush1.bf16.msra.mxu0 %v1125
        %1268 = vmatprep.subr.bf16.mxu0 0
        %1269 = vmatpush1.bf16.msra.mxu0 %v1126
        %1270 = vmatprep.subr.bf16.mxu0 0
        %1271 = vmatpush1.bf16.msra.mxu0 %v1127
        %1272 = vmatprep.subr.bf16.mxu0 0
        %1273 = vmatpush1.bf16.msra.mxu0 0
        %1274 = vmatprep.subr.bf16.mxu0 0
        %1275 = vmatpush1.bf16.msra.mxu0 0
        %1276 = vmatprep.subr.bf16.mxu0 0
        %1277 = vmatpush1.bf16.msra.mxu0 0
        %1278 = vmatprep.subr.bf16.mxu0 0
        %1279 = vmatpush1.bf16.msra.mxu0 0
        %1280 = vmatprep.subr.bf16.mxu0 0
        %1281 = vmatpush1.bf16.msra.mxu0 0
        %1282 = vmatprep.subr.bf16.mxu0 0
        %1283 = vmatpush1.bf16.msra.mxu0 0
        %1284 = vmatprep.subr.bf16.mxu0 0
        %1285 = vmatpush1.bf16.msra.mxu0 0
        %1286 = vmatprep.subr.bf16.mxu0 0
        %1287 = vmatpush1.bf16.msra.mxu0 0
        %1288 = vmatprep.mubr.bf16.mxu0 0
        %1289 = vmatmul.mubr.bf16.gmra.mrb[0].mxu0 %v1240
        %v1290 = vpop.f32.mrb[0].mxu0
        %v1291 = vadd.f32 %v1146, %v1290
        %v1292 = vpop.f32.mrb[0].mxu0
        %v1293 = vpop.f32.mrb[0].mxu0
        %v1294 = vadd.f32 %v1150, %v1293
        %v1295 = vpop.f32.mrb[0].mxu0
        %1296 = vmatprep.mubr.bf16.mxu0 0
        %1297 = vmatmul.mubr.bf16.gmra.mrb[0].mxu0 %v1241
        %v1298 = vpop.f32.mrb[0].mxu0
        %v1299 = vadd.f32 %v1154, %v1298
        %v1300 = vpop.f32.mrb[0].mxu0
        %v1301 = vpop.f32.mrb[0].mxu0
        %v1302 = vadd.f32 %v1158, %v1301
        %v1303 = vpop.f32.mrb[0].mxu0
        %1304 = vmatprep.mubr.bf16.mxu0 0
        %1305 = vmatmul.mubr.bf16.gmra.mrb[0].mxu0 %v1242
        %v1306 = vpop.f32.mrb[0].mxu0
        %v1307 = vadd.f32 %v1162, %v1306
        %v1308 = vpop.f32.mrb[0].mxu0
        %v1309 = vpop.f32.mrb[0].mxu0
        %v1310 = vadd.f32 %v1166, %v1309
        %v1311 = vpop.f32.mrb[0].mxu0
        %1312 = vmatprep.mubr.bf16.mxu0 0
        %1313 = vmatmul.mubr.bf16.gmra.mrb[0].mxu0 %v1243
        %v1314 = vpop.f32.mrb[0].mxu0
        %v1315 = vadd.f32 %v1170, %v1314
        %v1316 = vpop.f32.mrb[0].mxu0
        %v1317 = vpop.f32.mrb[0].mxu0
        %v1318 = vadd.f32 %v1174, %v1317
        %v1319 = vpop.f32.mrb[0].mxu0
        %1320 = vmatprep.mubr.bf16.mxu0 0
        %1321 = vmatmul.mubr.bf16.gmra.mrb[0].mxu0 %v1244
        %v1322 = vpop.f32.mrb[0].mxu0
        %v1323 = vadd.f32 %v1178, %v1322
        %v1324 = vpop.f32.mrb[0].mxu0
        %v1325 = vpop.f32.mrb[0].mxu0
        %v1326 = vadd.f32 %v1182, %v1325
        %v1327 = vpop.f32.mrb[0].mxu0
        %1328 = vmatprep.mubr.bf16.mxu0 0
        %1329 = vmatmul.mubr.bf16.gmra.mrb[0].mxu0 %v1245
        %v1330 = vpop.f32.mrb[0].mxu0
        %v1331 = vadd.f32 %v1186, %v1330
        %v1332 = vpop.f32.mrb[0].mxu0
        %v1333 = vpop.f32.mrb[0].mxu0
        %v1334 = vadd.f32 %v1190, %v1333
        %v1335 = vpop.f32.mrb[0].mxu0
        %1336 = vmatprep.mubr.bf16.mxu0 0
        %1337 = vmatmul.mubr.bf16.gmra.mrb[0].mxu0 %v1246
        %v1338 = vpop.f32.mrb[0].mxu0
        %v1339 = vadd.f32 %v1194, %v1338
        %v1340 = vpop.f32.mrb[0].mxu0
        %v1341 = vpop.f32.mrb[0].mxu0
        %v1342 = vadd.f32 %v1198, %v1341
        %v1343 = vpop.f32.mrb[0].mxu0
        %1344 = vmatprep.mubr.bf16.mxu0 0
        %1345 = vmatmul.mubr.bf16.gmra.mrb[0].mxu0 %v1247
        %v1346 = vpop.f32.mrb[0].mxu0
        %v1347 = vadd.f32 %v1202, %v1346
        %v1348 = vpop.f32.mrb[0].mxu0
        %v1349 = vpop.f32.mrb[0].mxu0
        %v1350 = vadd.f32 %v1206, %v1349
        %v1351 = vpop.f32.mrb[0].mxu0
        %1352 = vdwg.mxu0
        %v1353 = vmax.f32 %v1291, 0.0
        %v1354 = vmax.f32 %v1294, 0.0
        %v1355 = vmax.f32 %v1299, 0.0
        %v1356 = vmax.f32 %v1302, 0.0
        %v1357 = vmax.f32 %v1307, 0.0
        %v1358 = vmax.f32 %v1310, 0.0
        %v1359 = vmax.f32 %v1315, 0.0
        %v1360 = vmax.f32 %v1318, 0.0
        %v1361 = vmax.f32 %v1323, 0.0
        %v1362 = vmax.f32 %v1326, 0.0
        %v1363 = vmax.f32 %v1331, 0.0
        %v1364 = vmax.f32 %v1334, 0.0
        %v1365 = vmax.f32 %v1339, 0.0
        %v1366 = vmax.f32 %v1342, 0.0
        %v1367 = vmax.f32 %v1347, 0.0
        %v1368 = vmax.f32 %v1350, 0.0
        %1369 = vset.pattern.permute.xlu0 4
        %1370 = vperm.xlu0 %1369, %v284
        %v1371 = vpop.permute.xlu0 %1370
        %1373 = vset.pattern.permute.xlu0 4
        %1374 = vperm.xlu0 %1373, %v285
        %v1375 = vpop.permute.xlu0 %1374
        %1377 = vset.pattern.permute.xlu0 4
        %1378 = vperm.xlu0 %1377, %v286
        %v1379 = vpop.permute.xlu0 %1378
        %1381 = vset.pattern.permute.xlu0 4
        %1382 = vperm.xlu0 %1381, %v287
        %v1383 = vpop.permute.xlu0 %1382
        %1385 = vset.pattern.permute.xlu0 4
        %1386 = vperm.xlu0 %1385, %v288
        %v1387 = vpop.permute.xlu0 %1386
        %1389 = vset.pattern.permute.xlu0 4
        %1390 = vperm.xlu0 %1389, %v289
        %v1391 = vpop.permute.xlu0 %1390
        %1393 = vset.pattern.permute.xlu0 4
        %1394 = vperm.xlu0 %1393, %v290
        %v1395 = vpop.permute.xlu0 %1394
        %1397 = vset.pattern.permute.xlu0 4
        %1398 = vperm.xlu0 %1397, %v291
        %v1399 = vpop.permute.xlu0 %1398
        %1401 = vset.pattern.permute.xlu0 4
        %1402 = vperm.xlu0 %1401, %v292
        %v1403 = vpop.permute.xlu0 %1402
        %1405 = vset.pattern.permute.xlu0 4
        %1406 = vperm.xlu0 %1405, %v293
        %v1407 = vpop.permute.xlu0 %1406
        %1409 = vset.pattern.permute.xlu0 4
        %1410 = vperm.xlu0 %1409, %v294
        %v1411 = vpop.permute.xlu0 %1410
        %1413 = vset.pattern.permute.xlu0 4
        %1414 = vperm.xlu0 %1413, %v295
        %v1415 = vpop.permute.xlu0 %1414
        %1417 = vset.pattern.permute.xlu0 4
        %1418 = vperm.xlu0 %1417, %v296
        %v1419 = vpop.permute.xlu0 %1418
        %1421 = vset.pattern.permute.xlu0 4
        %1422 = vperm.xlu0 %1421, %v297
        %v1423 = vpop.permute.xlu0 %1422
        %1425 = vset.pattern.permute.xlu0 4
        %1426 = vperm.xlu0 %1425, %v298
        %v1427 = vpop.permute.xlu0 %1426
        %1429 = vset.pattern.permute.xlu0 4
        %1430 = vperm.xlu0 %1429, %v299
        %v1431 = vpop.permute.xlu0 %1430
        %v1433 = vmul.f32 %v1371, %v1353
        %v1434 = vmul.f32 %v1375, %v1354
        %v1435 = vmul.f32 %v1379, %v1355
        %v1436 = vmul.f32 %v1383, %v1356
        %v1437 = vmul.f32 %v1387, %v1357
        %v1438 = vmul.f32 %v1391, %v1358
        %v1439 = vmul.f32 %v1395, %v1359
        %v1440 = vmul.f32 %v1399, %v1360
        %v1441 = vmul.f32 %v1403, %v1361
        %v1442 = vmul.f32 %v1407, %v1362
        %v1443 = vmul.f32 %v1411, %v1363
        %v1444 = vmul.f32 %v1415, %v1364
        %v1445 = vmul.f32 %v1419, %v1365
        %v1446 = vmul.f32 %v1423, %v1366
        %v1447 = vmul.f32 %v1427, %v1367
        %v1448 = vmul.f32 %v1431, %v1368
        %v1449 = vadd.f32 %v1433, %v1434
        %v1450 = vadd.f32 %v1449, %v1435
        %v1451 = vadd.f32 %v1450, %v1436
        %v1452 = vadd.f32 %v1451, %v1437
        %v1453 = vadd.f32 %v1452, %v1438
        %v1454 = vadd.f32 %v1453, %v1439
        %v1455 = vadd.f32 %v1454, %v1440
        %v1456 = vadd.f32 %v1455, %v1441
        %v1457 = vadd.f32 %v1456, %v1442
        %v1458 = vadd.f32 %v1457, %v1443
        %v1459 = vadd.f32 %v1458, %v1444
        %v1460 = vadd.f32 %v1459, %v1445
        %v1461 = vadd.f32 %v1460, %v1446
        %v1462 = vadd.f32 %v1461, %v1447
        %v1463 = vadd.f32 %v1462, %v1448
        %v1464 = vrot.slane %v1463, 4
        %v1465 = vadd.f32 %v1463, %v1464
        %v1466 = vrot.slane %v1465, 2
        %v1467 = vadd.f32 %v1465, %v1466
        %v1468 = vrot.slane %v1467, 1
        %v1469 = vadd.f32 %v1467, %v1468
        %v1470 = vld [vmem:[%s5] sm:$0x1]
        %1472 = vset.pattern.permute.xlu0 5
        %1473 = vperm.xlu0 %1472, %v1470
        %v1474 = vpop.permute.xlu0 %1473
        %v1476 = vadd.f32 %v1469, %v1474
        %v1477 = vxor.u32 %v1476, 2147483648
        %v1478 = vmul.f32 %v1477, 1.442695
        %v1479 = vpow.pop %v1478
        %v1480 = vadd.f32 %v1479, 1.0
        %v1481 = vrcp.pop %v1480
        %v1482 = vmul.f32 1.0, %v1481
        %1483 = vst [vmem:[%s244] sm:$0x1] %v1482
        %s1484 = sand.u32 %s159, 1
        %s1485 = scalar_lea.sflag [#allocation3], %s1484
        %s1486 = sand.u32 %s159, 1
        %s1487 = scalar_lea.vmem [#allocation2], %s1486
        // Predicated region
        $region45: #{tpu_custom_call.1} parent=43 // pred_check
          %p1488 = pneg %p169
        $region46: #{tpu_custom_call.1} parent=43 // pred_check_branch
          %1490 = sbr.rel (%p1488) target = $region48
        $region47: #{tpu_custom_call.1} parent=43 // pred_region
          %s1492 = ssub.s32 16, 16
          %1493 = vsyncadd %s1485, %s1492
          %s1494 = smul.addr %s20, 16
          %s1495 = scalar_lea.hbm %s6, %s1494
          %s1497 = sshll.u32 %s1487, 4
          %s1498 = int_to_ptr.vmem [resolvable:$true] %s1497
          %1500 = dma.vmem_to_hbm [thread:$0]  %s1498, 16, %s1495, %s1485
        $region48: #{tpu_custom_call.1} parent=43 // pred_fallthru
          _
      $region44: #{tpu_custom_call.1} parent=5 // pred_fallthru
        _
      %p1501 = scmp.le.s32.totalorder 2, %s15
      // Predicated region
      $region49: #{tpu_custom_call.1} parent=5 // pred_check
        %p1502 = pneg %p1501
      $region50: #{tpu_custom_call.1} parent=5 // pred_check_branch
        %1504 = sbr.rel (%p1502) target = $region52
      $region51: #{tpu_custom_call.1} parent=5 // pred_region
        %s1505 = ssub.s32 %s15, 2
        // Predicated region
        $region53: #{tpu_custom_call.1} parent=51 // pred_check
          %p1506 = pneg %p175
        $region54: #{tpu_custom_call.1} parent=51 // pred_check_branch
          %1508 = sbr.rel (%p1506) target = $region56
        $region55: #{tpu_custom_call.1} parent=51 // pred_region
          %s1509 = sand.u32 %s160, 1
          %s1510 = scalar_lea.sflag [#allocation3], %s1509
          %s1511 = sand.u32 %s160, 1
          %s1512 = scalar_lea.vmem [#allocation2], %s1511
          %1513 = dma.done %s1510, 16
        $region56: #{tpu_custom_call.1} parent=51 // pred_fallthru
          _
      $region52: #{tpu_custom_call.1} parent=5 // pred_fallthru
        _
    $region6: #{tpu_custom_call.1} parent=1 // loop_footer
      %s19 = sadd.s32 1, %s15
    $region7: #{tpu_custom_call.1} parent=1 // loop_footer_branch
      %14 = sbr.rel target = $region3
    $region8: #{tpu_custom_call.1} parent=1 // loop_exit
      _
    %1514 = vsyncpa [#allocation3], 1
    %s1515 = scalar_lea.sflag [#allocation3], 1
    %1516 = vsyncpa %s1515, 1

</llo_original>
